<compile_context>
chip_gen: v7x
topology: tpu7x:2x2x1
jax: 0.10.0
libtpu: 0.0.40
codegen_flags: <defaults>
</compile_context>

<pallas_src>
import jax
import jax.numpy as jnp
from jax.experimental import pallas as pl
from jax.experimental.pallas import tpu as pltpu


def _round_up(x, m):
    return (x + m - 1) // m * m


def _largest_divisor_at_most(n, target):
    t = max(1, min(target, n))
    while n % t:
        t -= 1
    return t


def _conv_stats_kernel(p_ref, w_ref, stat_ref):
    """Pass 1: conv tile -> per-channel [sum, sum_of_squares] partials for this tile."""
    tr, wblk, kp = p_ref.shape
    patches = p_ref[...].reshape(tr * wblk, kp)
    conv = jnp.dot(patches, w_ref[...], preferred_element_type=jnp.float32)  # (tr*W, C_pad)
    s1 = jnp.sum(conv, axis=0, keepdims=True)            # (1, C_pad)
    s2 = jnp.sum(conv * conv, axis=0, keepdims=True)     # (1, C_pad)
    stat_ref[...] = jnp.concatenate([s1, s2], axis=0).reshape(1, 2, -1)


def _conv_bn_relu_upsample_kernel(p_ref, w_ref, ss_ref, o_ref):
    """Pass 2: conv tile -> folded BN affine -> ReLU -> 2x nearest upsample (in-register)."""
    tr, wblk, kp = p_ref.shape
    cp = w_ref.shape[1]
    patches = p_ref[...].reshape(tr * wblk, kp)
    conv = jnp.dot(patches, w_ref[...], preferred_element_type=jnp.float32)  # (tr*W, C_pad)
    scale = ss_ref[0:1, :]                                # (1, C_pad)
    shift = ss_ref[1:2, :]
    y = jnp.maximum(conv * scale + shift, 0.0)            # f32 epilogue (v5e-friendly)
    y = y.reshape(tr, wblk, cp)
    # 2x2 nearest replication via a leading-dim broadcast; single unmasked full-block store.
    o_ref[...] = jnp.broadcast_to(y[None, None], o_ref.shape).astype(o_ref.dtype)


def upconv_forward(x_nchw, w_oihw, bias, gamma, beta, *, eps=1e-5,
                   block_m_target=1024, matmul_dtype=jnp.float32,
                   vmem_limit_bytes=48 * 1024 * 1024):
    """Forward of UpConv: Conv2d(padding='same') -> Upsample(2, nearest) -> BatchNorm2d -> ReLU."""
    del bias  # exactly cancelled by training-mode BatchNorm mean subtraction
    N, Cin, H, W = x_nchw.shape
    Cout, Cin2, KH, KW = w_oihw.shape
    assert Cin2 == Cin
    assert KH % 2 == 1 and KW % 2 == 1, "'same' padding implemented for odd kernels"
    ph, pw = KH // 2, KW // 2

    K = KH * KW * Cin
    K_PAD = _round_up(K, 128)          # lane-dense contraction (unmasked loads)
    C_PAD = _round_up(Cout, 128)       # lane-dense output channels (unmasked stores)
    NH = N * H
    M = NH * W

    # ---- wrapper glue: NCHW -> NHWC, spatial pad, im2col with taps folded into K ----
    x = jnp.transpose(x_nchw, (0, 2, 3, 1))
    xp = jnp.pad(x, ((0, 0), (ph, ph), (pw, pw), (0, 0)))
    taps = [xp[:, ky:ky + H, kx:kx + W, :] for ky in range(KH) for kx in range(KW)]
    patches = jnp.concatenate(taps, axis=-1)                          # (N, H, W, K), tap-major
    patches = jnp.pad(patches, ((0, 0), (0, 0), (0, 0), (0, K_PAD - K)))
    patches = patches.reshape(NH, W, K_PAD).astype(matmul_dtype)
    # NOTE: matmul_dtype=jnp.bfloat16 halves HBM/VMEM bytes and doubles MXU rate on v6e/v7x.

    w_mat = jnp.transpose(w_oihw, (2, 3, 1, 0)).reshape(K, Cout)      # (ky,kx,ci) x Cout
    w_mat = jnp.pad(w_mat, ((0, K_PAD - K), (0, C_PAD - Cout))).astype(matmul_dtype)

    gamma_p = jnp.pad(gamma.astype(jnp.float32), (0, C_PAD - Cout))
    beta_p = jnp.pad(beta.astype(jnp.float32), (0, C_PAD - Cout))

    # ---- tiling over the (N*H) image-row axis ----
    tr = _largest_divisor_at_most(NH, max(1, block_m_target // W))
    num_tiles = NH // tr

    cparams = pltpu.CompilerParams(
        dimension_semantics=("parallel",),     # shards row tiles across TCs on v7x megacore
        vmem_limit_bytes=vmem_limit_bytes,
    )

    # ---- pass 1: per-tile per-channel sum / sum-of-squares of the conv output ----
    partials = pl.pallas_call(
        _conv_stats_kernel,
        out_shape=jax.ShapeDtypeStruct((num_tiles, 2, C_PAD), jnp.float32),
        grid=(num_tiles,),
        in_specs=[
            pl.BlockSpec((tr, W, K_PAD), lambda i: (i, 0, 0)),
            pl.BlockSpec((K_PAD, C_PAD), lambda i: (0, 0)),
        ],
        out_specs=pl.BlockSpec((1, 2, C_PAD), lambda i: (i, 0, 0)),
        compiler_params=cparams,
    )(patches, w_mat)

    # ---- fold BatchNorm (training-mode batch stats, biased var) into scale/shift per channel ----
    stats = jnp.sum(partials, axis=0)                                  # (2, C_PAD), f32 accum
    mean = stats[0] / M
    var = jnp.maximum(stats[1] / M - mean * mean, 0.0)
    scale = gamma_p * jax.lax.rsqrt(var + eps)
    shift = beta_p - mean * scale
    scale_shift = jnp.stack([scale, shift], axis=0)                    # (2, C_PAD)

    # ---- pass 2: conv + BN affine + ReLU + fused 2x nearest upsample ----
    up = pl.pallas_call(
        _conv_bn_relu_upsample_kernel,
        out_shape=jax.ShapeDtypeStruct((2, 2, NH, W, C_PAD), jnp.float32),
        grid=(num_tiles,),
        in_specs=[
            pl.BlockSpec((tr, W, K_PAD), lambda i: (i, 0, 0)),
            pl.BlockSpec((K_PAD, C_PAD), lambda i: (0, 0)),
            pl.BlockSpec((2, C_PAD), lambda i: (0, 0)),
        ],
        out_specs=pl.BlockSpec((2, 2, tr, W, C_PAD), lambda i: (0, 0, i, 0, 0)),
        compiler_params=cparams,
    )(patches, w_mat, scale_shift)

    # ---- wrapper glue: drop channel pad, (a, b, n, h, w, c) -> NCHW at 2x spatial ----
    up = up[..., :Cout].reshape(2, 2, N, H, W, Cout)
    out = jnp.transpose(up, (2, 5, 3, 0, 4, 1))                        # (N, C, H, 2, W, 2)
    return out.reshape(N, Cout, 2 * H, 2 * W)


def upconv_reference(x, w, b, gamma, beta, eps=1e-5):
    """Pure-JAX reference matching the PyTorch module (training-mode BatchNorm)."""
    y = jax.lax.conv_general_dilated(
        x.astype(jnp.float32), w.astype(jnp.float32),
        window_strides=(1, 1), padding="SAME",
        dimension_numbers=("NCHW", "OIHW", "NCHW"),
        precision=jax.lax.Precision.HIGHEST,
    ) + b.reshape(1, -1, 1, 1)
    y = jnp.repeat(jnp.repeat(y, 2, axis=2), 2, axis=3)                # nearest 2x
    mean = jnp.mean(y, axis=(0, 2, 3), keepdims=True)
    var = jnp.var(y, axis=(0, 2, 3), keepdims=True)                    # biased, as in BN
    y = (y - mean) * jax.lax.rsqrt(var + eps)
    y = y * gamma.reshape(1, -1, 1, 1) + beta.reshape(1, -1, 1, 1)
    return jnp.maximum(y, 0.0)


if __name__ == "__main__":
    key = jax.random.PRNGKey(0)
    kx, kw_, kb, kg, kbe = jax.random.split(key, 5)

    # UpConv(in_channels=4, out_channels=8, kernel=3), x: (N=2, C=4, H=16, W=16)
    N, Cin, H, W = 2, 4, 16, 16
    Cout, Ksz = 8, 3

    x = jax.random.normal(kx, (N, Cin, H, W), jnp.float32)
    w = jax.random.normal(kw_, (Cout, Cin, Ksz, Ksz), jnp.float32) * 0.1   # Conv2d.weight (OIHW)
    b = jax.random.normal(kb, (Cout,), jnp.float32) * 0.1                  # Conv2d.bias
    gamma = 1.0 + 0.1 * jax.random.normal(kg, (Cout,), jnp.float32)        # BatchNorm2d.weight
    beta = 0.1 * jax.random.normal(kbe, (Cout,), jnp.float32)              # BatchNorm2d.bias

    # Small block target so the toy problem still runs a multi-step (pipelined) grid.
    out = upconv_forward(x, w, b, gamma, beta, block_m_target=128)
    out = jax.block_until_ready(out)

    assert out.shape == (N, Cout, 2 * H, 2 * W), out.shape
    assert bool(jnp.all(out >= 0.0))                                       # ReLU sanity check

    ref = jax.block_until_ready(upconv_reference(x, w, b, gamma, beta))
    max_err = float(jnp.max(jnp.abs(out - ref)))
    assert max_err < 5e-2, f"max abs error vs reference: {max_err}"

    print("KERNEL_OK")
</pallas_src>

<mosaic_0001>
module attributes {stable_mosaic.version = 11 : i64} {
  func.func @_conv_stats_kernel(%arg0: i32, %arg1: memref<8x16x128xf32, #tpu.memory_space<vmem>>, %arg2: memref<128x128xf32, #tpu.memory_space<vmem>>, %arg3: memref<1x2x128xf32, #tpu.memory_space<vmem>>) attributes {dimension_semantics = [#tpu.dimension_semantics<parallel>], iteration_bounds = array<i64: 4>, scalar_prefetch = 0 : i64, scratch_operands = 0 : i64, tpu.core_type = #tpu.core_type<tc>, window_params = [{transform_indices = @transform_0, window_bounds = array<i64: 8, 16, 128>}, {pipeline_mode = #tpu.pipeline_mode<synchronous>, transform_indices = @transform_1, window_bounds = array<i64: 128, 128>}, {transform_indices = @transform_2, window_bounds = array<i64: 1, 2, 128>}]} {
    %c0 = arith.constant 0 : index
    %c0_0 = arith.constant 0 : index
    %c0_1 = arith.constant 0 : index
    %0 = vector.load %arg1[%c0, %c0_0, %c0_1] : memref<8x16x128xf32, #tpu.memory_space<vmem>>, vector<8x16x128xf32>
    %1 = vector.shape_cast %0 : vector<8x16x128xf32> to vector<128x128xf32>
    %c0_2 = arith.constant 0 : index
    %c0_3 = arith.constant 0 : index
    %2 = vector.load %arg2[%c0_2, %c0_3] : memref<128x128xf32, #tpu.memory_space<vmem>>, vector<128x128xf32>
    %cst = arith.constant dense<0.000000e+00> : vector<128x128xf32>
    %3 = tpu.matmul %1, %2, %cst {dimension_numbers = #tpu.dot_dimension_numbers<[1], [0], [0], [1], [0, 0, 1, 1], [], []>} : vector<128x128xf32>, vector<128x128xf32>, vector<128x128xf32> -> vector<128x128xf32>
    %cst_4 = arith.constant dense<0.000000e+00> : vector<128xf32>
    %4 = vector.multi_reduction <add>, %3, %cst_4 [0] : vector<128x128xf32> to vector<128xf32>
    %5 = vector.shape_cast %4 : vector<128xf32> to vector<1x128xf32>
    %6 = arith.mulf %3, %3 : vector<128x128xf32>
    %cst_5 = arith.constant dense<0.000000e+00> : vector<128xf32>
    %7 = vector.multi_reduction <add>, %6, %cst_5 [0] : vector<128x128xf32> to vector<128xf32>
    %8 = vector.shape_cast %7 : vector<128xf32> to vector<1x128xf32>
    %9 = tpu.concatenate %5, %8 in 0 : vector<1x128xf32>, vector<1x128xf32> -> vector<2x128xf32>
    %10 = vector.shape_cast %9 : vector<2x128xf32> to vector<1x2x128xf32>
    %c0_6 = arith.constant 0 : index
    %c0_7 = arith.constant 0 : index
    %c0_8 = arith.constant 0 : index
    %11 = vector.load %arg3[%c0_6, %c0_7, %c0_8] : memref<1x2x128xf32, #tpu.memory_space<vmem>>, vector<1x2x128xf32>
    tpu.vector_store %arg3[%c0_6, %c0_7, %c0_8], %10 {strides = array<i32>} : memref<1x2x128xf32, #tpu.memory_space<vmem>>, vector<1x2x128xf32>,
    return
  }
  func.func @transform_0(%arg0: i32) -> (i32, i32, i32) {
    %c0_i32 = arith.constant 0 : i32
    %c0_i32_0 = arith.constant 0 : i32
    %c0_i32_1 = arith.constant 0 : i32
    return %arg0, %c0_i32, %c0_i32_0 : i32, i32, i32
  }
  func.func @transform_1(%arg0: i32) -> (i32, i32) {
    %c0_i32 = arith.constant 0 : i32
    %c0_i32_0 = arith.constant 0 : i32
    %c0_i32_1 = arith.constant 0 : i32
    return %c0_i32, %c0_i32_0 : i32, i32
  }
  func.func @transform_2(%arg0: i32) -> (i32, i32, i32) {
    %c0_i32 = arith.constant 0 : i32
    %c0_i32_0 = arith.constant 0 : i32
    %c0_i32_1 = arith.constant 0 : i32
    return %arg0, %c0_i32, %c0_i32_0 : i32, i32, i32
  }
}

</mosaic_0001>

<llo_original>
// kernel: tpu_custom_call.1
$region0: #{tpu_custom_call.1}
  #allocation0 [shape = 'u32[]', space=smem, size = 0x4, offset = 0x4, fixed_abs, tag = 'smem constant byte address 0x4 - core index']
  #allocation1 [shape = 'u32[144,128]{1,0:T(1,128)}', space=vmem, size = 0x12000, scoped, tag = 'internal scratch']
  %s0 = inlined_call_operand.hbm [shape: f32[32,16,128], index: 0, kind: input, shape index: {}]
  %s1 = inlined_call_operand.hbm [shape: f32[128,128], index: 1, kind: input, shape index: {}]
  %s2 = inlined_call_operand.hbm [shape: f32[4,2,128], index: 2, kind: output, shape index: {}]
  %s3 = sld [smem:[#allocation0]]
  $region49: #{tpu_custom_call.1} parent=0
    _
  %s5 = ssub.s32 1, %s3
  %s6 = scalar_select 0, %s5, %s3
  $region1: #{tpu_custom_call.1} parent=0
    #allocation2 [shape = 'u8[131072]{0}', space=vmem, size = 0x20000, scoped, tag = 'input window, operand 0']
    #allocation3 [shape = 's32[2]{0}', space=sflag, size = 0x8, scoped, tag = 'scoped memory for tpu_custom_call.1']
    #allocation4 [shape = 's32[2]{0}', space=sflag, size = 0x8, scoped, tag = 'scoped memory for tpu_custom_call.1']
    #allocation5 [shape = 'u8[65536]{0}', space=vmem, size = 0x10000, scoped, tag = 'input window, operand 1, single buffered']
    #allocation6 [shape = 's32[1]{0}', space=sflag, size = 0x4, scoped, tag = 'scoped memory for tpu_custom_call.1']
    #allocation7 [shape = 'u8[2048]{0}', space=vmem, size = 0x800, scoped, tag = 'output window, operand 0']
    %7 = vsyncpa [#allocation3], 0
    %s8 = scalar_lea.sflag [#allocation3], 1
    %9 = vsyncpa %s8, 0
    %10 = vsyncpa [#allocation6], 0
    %11 = vsyncpa [#allocation4], 0
    %s12 = scalar_lea.sflag [#allocation4], 1
    %13 = vsyncpa %s12, 0
    loop: start=0, step=1, limit=6
    $region2: #{tpu_custom_call.1} parent=1 // loop_pre_header
      _
    $region3: #{tpu_custom_call.1} parent=1 // loop_header
      %s15 = sphi 0, %s19
      %p16 = scmp.ge.s32.totalorder %s15, 6
      %s25 = sphi 0, %s27
      %s28 = sphi 0, %s25
      %s29 = sphi 0, %s28
      %s45 = sphi 0, %s29
      %s49 = sphi 0, %s49
      %s51 = sphi 0, %s49
      %s52 = sphi 0, %s51
      %s66 = sphi 0, %s52
      %s72 = sphi 0, %s74
      %s75 = sphi 0, %s72
      %s76 = sphi 0, %s75
      %s92 = sphi 0, %s76
    $region4: #{tpu_custom_call.1} parent=1 // loop_header_branch
      %18 = sbr.rel (%p16) target = $region8
    $region5: #{tpu_custom_call.1} parent=1 // loop_body
      %s20 = ssub.s32 %s15, 1
      %s21 = ssub.s32 %s15, 2
      %s22 = sadd.s32 %s15, 1
      %s23 = ssub.s32 %s15, %s22
      %p24 = scmp.eq.s32.totalorder %s23, 0
      %s26 = sadd.s32 %s25, 1
      %s27 = scalar_select %p24, %s25, %s26
      %p30 = pneg %p24
      %p31 = scmp.eq.s32.totalorder %s15, 3
      %p32 = por %p30, %p31
      %p33 = scmp.ne.s32.totalorder %s25, %s28
      %p34 = scmp.eq.s32.totalorder %s15, 0
      %p35 = por %p33, %p34
      %p36 = scmp.ne.s32.totalorder %s25, %s28
      %p37 = scmp.eq.s32.totalorder %s20, 3
      %p38 = por %p36, %p37
      %p39 = scmp.ne.s32.totalorder %s28, %s29
      %p40 = scmp.eq.s32.totalorder %s20, 0
      %p41 = por %p39, %p40
      %p42 = scmp.ne.s32.totalorder %s28, %s29
      %p43 = scmp.eq.s32.totalorder %s21, 3
      %p44 = por %p42, %p43
      %p46 = scmp.ne.s32.totalorder %s29, %s45
      %p47 = scmp.eq.s32.totalorder %s21, 0
      %p48 = por %p46, %p47
      %s50 = sadd.s32 %s49, 1
      %p53 = scmp.eq.s32.totalorder %s15, 3
      %p54 = scmp.ne.s32.totalorder %s49, %s51
      %p55 = scmp.eq.s32.totalorder %s15, 0
      %p56 = por %p54, %p55
      %p57 = scmp.ne.s32.totalorder %s49, %s51
      %p58 = scmp.eq.s32.totalorder %s20, 3
      %p59 = por %p57, %p58
      %p60 = scmp.ne.s32.totalorder %s51, %s52
      %p61 = scmp.eq.s32.totalorder %s20, 0
      %p62 = por %p60, %p61
      %p63 = scmp.ne.s32.totalorder %s51, %s52
      %p64 = scmp.eq.s32.totalorder %s21, 3
      %p65 = por %p63, %p64
      %p67 = scmp.ne.s32.totalorder %s52, %s66
      %p68 = scmp.eq.s32.totalorder %s21, 0
      %p69 = por %p67, %p68
      %s70 = ssub.s32 %s15, %s22
      %p71 = scmp.eq.s32.totalorder %s70, 0
      %s73 = sadd.s32 %s72, 1
      %s74 = scalar_select %p71, %s72, %s73
      %p77 = pneg %p71
      %p78 = scmp.eq.s32.totalorder %s15, 3
      %p79 = por %p77, %p78
      %p80 = scmp.ne.s32.totalorder %s72, %s75
      %p81 = scmp.eq.s32.totalorder %s15, 0
      %p82 = por %p80, %p81
      %p83 = scmp.ne.s32.totalorder %s72, %s75
      %p84 = scmp.eq.s32.totalorder %s20, 3
      %p85 = por %p83, %p84
      %p86 = scmp.ne.s32.totalorder %s75, %s76
      %p87 = scmp.eq.s32.totalorder %s20, 0
      %p88 = por %p86, %p87
      %p89 = scmp.ne.s32.totalorder %s75, %s76
      %p90 = scmp.eq.s32.totalorder %s21, 3
      %p91 = por %p89, %p90
      %p93 = scmp.ne.s32.totalorder %s76, %s92
      %p94 = scmp.eq.s32.totalorder %s21, 0
      %p95 = por %p93, %p94
      %p96 = scmp.le.s32.totalorder 1, %s15
      %p97 = scmp.lt.s32.totalorder %s15, 5
      %p98 = pnand %p96, %p97
      %p99 = pneg %p98
      // Predicated region
      $region9: #{tpu_custom_call.1} parent=5 // pred_check
        _
      $region10: #{tpu_custom_call.1} parent=5 // pred_check_branch
        %101 = sbr.rel (%p98) target = $region12
      $region11: #{tpu_custom_call.1} parent=5 // pred_region
        %s102 = ssub.s32 %s15, 1
        // Predicated region
        $region13: #{tpu_custom_call.1} parent=11 // pred_check
          %p103 = pneg %p62
        $region14: #{tpu_custom_call.1} parent=11 // pred_check_branch
          %105 = sbr.rel (%p103) target = $region16
        $region15: #{tpu_custom_call.1} parent=11 // pred_region
          %s107 = ssub.s32 2048, 2048
          %108 = vsyncadd [#allocation6], %s107
          %s109 = sshll.u32 [#allocation5], 4
          %s110 = int_to_ptr.vmem [resolvable:$true] %s109
          %115 = dma.hbm_to_vmem [thread:$0]  %s1, 2048, %s110, [#allocation6], 128, 128, 8
        $region16: #{tpu_custom_call.1} parent=11 // pred_fallthru
          _
      $region12: #{tpu_custom_call.1} parent=5 // pred_fallthru
        _
      %p116 = scmp.lt.s32.totalorder %s15, 4
      // Predicated region
      $region17: #{tpu_custom_call.1} parent=5 // pred_check
        %p117 = pneg %p116
      $region18: #{tpu_custom_call.1} parent=5 // pred_check_branch
        %119 = sbr.rel (%p117) target = $region20
      $region19: #{tpu_custom_call.1} parent=5 // pred_region
        // Predicated region
        $region21: #{tpu_custom_call.1} parent=19 // pred_check
          %p120 = pneg %p35
        $region22: #{tpu_custom_call.1} parent=19 // pred_check_branch
          %122 = sbr.rel (%p120) target = $region24
        $region23: #{tpu_custom_call.1} parent=19 // pred_region
          %s123 = sand.u32 %s25, 1
          %s124 = scalar_lea.sflag [#allocation3], %s123
          %s125 = sand.u32 %s25, 1
          %s126 = smul.addr %s125, 128
          %s127 = scalar_lea.vmem [#allocation2], %s126
          %s128 = smul.u32 8, %s15
          %s130 = ssub.s32 2048, 2048
          %131 = vsyncadd %s124, %s130
          %s132 = smul.addr %s128, 2
          %s133 = smul.addr %s132, 128
          %s134 = scalar_lea.hbm %s0, %s133
          %s135 = sshll.u32 %s127, 4
          %s136 = int_to_ptr.vmem [resolvable:$true] %s135
          %141 = dma.hbm_to_vmem [thread:$0]  %s134, 2048, %s136, %s124, 128, 128, 8
        $region24: #{tpu_custom_call.1} parent=19 // pred_fallthru
          _
      $region20: #{tpu_custom_call.1} parent=5 // pred_fallthru
        _
      %p142 = scmp.le.s32.totalorder 1, %s15
      %p143 = scmp.lt.s32.totalorder %s15, 5
      %p144 = pnand %p142, %p143
      %p145 = pneg %p144
      // Predicated region
      $region25: #{tpu_custom_call.1} parent=5 // pred_check
        _
      $region26: #{tpu_custom_call.1} parent=5 // pred_check_branch
        %147 = sbr.rel (%p144) target = $region28
      $region27: #{tpu_custom_call.1} parent=5 // pred_region
        %s148 = ssub.s32 %s15, 1
        %s149 = sand.u32 %s28, 1
        %s150 = scalar_lea.sflag [#allocation3], %s149
        %s151 = sand.u32 %s28, 1
        %s152 = smul.addr %s151, 128
        %s153 = scalar_lea.vmem [#allocation2], %s152
        // Predicated region
        $region29: #{tpu_custom_call.1} parent=27 // pred_check
          %p154 = pneg %p41
        $region30: #{tpu_custom_call.1} parent=27 // pred_check_branch
          %156 = sbr.rel (%p154) target = $region32
        $region31: #{tpu_custom_call.1} parent=27 // pred_region
          %157 = dma.done %s150, 2048
        $region32: #{tpu_custom_call.1} parent=27 // pred_fallthru
          _
        // Predicated region
        $region33: #{tpu_custom_call.1} parent=27 // pred_check
          %p158 = pneg %p62
        $region34: #{tpu_custom_call.1} parent=27 // pred_check_branch
          %160 = sbr.rel (%p158) target = $region36
        $region35: #{tpu_custom_call.1} parent=27 // pred_region
          %161 = dma.done [#allocation6], 2048
        $region36: #{tpu_custom_call.1} parent=27 // pred_fallthru
          _
        %s162 = sand.u32 %s28, 1
        %s163 = scalar_lea.sflag [#allocation3], %s162
        %s164 = sand.u32 %s28, 1
        %s165 = smul.addr %s164, 128
        %s166 = scalar_lea.vmem [#allocation2], %s165
        %p167 = pneg %p41
        %p168 = pneg %p38
        %p169 = pneg %p62
        %p170 = pneg %p59
        %p171 = pneg %p88
        %p172 = pneg %p85
        %s173 = sand.u32 %s75, 1
        %s174 = scalar_lea.sflag [#allocation4], %s173
        %s175 = sand.u32 %s75, 1
        %s176 = smul.addr %s175, 2
        %s177 = scalar_lea.vmem [#allocation7], %s176
        %s178 = smul.u32 8, %s20
        %v179 = vld [vmem:[%s153] sm:$0xff]
        %v180 = vld [vmem:[%s153 + $0x8] sm:$0xff]
        %v181 = vld [vmem:[%s153 + $0x10] sm:$0xff]
        %v182 = vld [vmem:[%s153 + $0x18] sm:$0xff]
        %v183 = vld [vmem:[%s153 + $0x20] sm:$0xff]
        %v184 = vld [vmem:[%s153 + $0x28] sm:$0xff]
        %v185 = vld [vmem:[%s153 + $0x30] sm:$0xff]
        %v186 = vld [vmem:[%s153 + $0x38] sm:$0xff]
        %v187 = vld [vmem:[%s153 + $0x40] sm:$0xff]
        %v188 = vld [vmem:[%s153 + $0x48] sm:$0xff]
        %v189 = vld [vmem:[%s153 + $0x50] sm:$0xff]
        %v190 = vld [vmem:[%s153 + $0x58] sm:$0xff]
        %v191 = vld [vmem:[%s153 + $0x60] sm:$0xff]
        %v192 = vld [vmem:[%s153 + $0x68] sm:$0xff]
        %v193 = vld [vmem:[%s153 + $0x70] sm:$0xff]
        %v194 = vld [vmem:[%s153 + $0x78] sm:$0xff]
        %v195 = vld [vmem:[#allocation5] sm:$0xff]
        %v196 = vld [vmem:[#allocation5 + $0x8] sm:$0xff]
        %v197 = vld [vmem:[#allocation5 + $0x10] sm:$0xff]
        %v198 = vld [vmem:[#allocation5 + $0x18] sm:$0xff]
        %v199 = vld [vmem:[#allocation5 + $0x20] sm:$0xff]
        %v200 = vld [vmem:[#allocation5 + $0x28] sm:$0xff]
        %v201 = vld [vmem:[#allocation5 + $0x30] sm:$0xff]
        %v202 = vld [vmem:[#allocation5 + $0x38] sm:$0xff]
        %v203 = vld [vmem:[#allocation5 + $0x40] sm:$0xff]
        %v204 = vld [vmem:[#allocation5 + $0x48] sm:$0xff]
        %v205 = vld [vmem:[#allocation5 + $0x50] sm:$0xff]
        %v206 = vld [vmem:[#allocation5 + $0x58] sm:$0xff]
        %v207 = vld [vmem:[#allocation5 + $0x60] sm:$0xff]
        %v208 = vld [vmem:[#allocation5 + $0x68] sm:$0xff]
        %v209 = vld [vmem:[#allocation5 + $0x70] sm:$0xff]
        %v210 = vld [vmem:[#allocation5 + $0x78] sm:$0xff]
        %211 = vmatprep.subr.mxu0 0.0
        %212 = vmatpush1.msra.mxu0 %v195
        %213 = vmatprep.subr.mxu0 0.0
        %214 = vmatpush1.msra.mxu0 %v196
        %215 = vmatprep.subr.mxu0 0.0
        %216 = vmatpush1.msra.mxu0 %v197
        %217 = vmatprep.subr.mxu0 0.0
        %218 = vmatpush1.msra.mxu0 %v198
        %219 = vmatprep.subr.mxu0 0.0
        %220 = vmatpush1.msra.mxu0 %v199
        %221 = vmatprep.subr.mxu0 0.0
        %222 = vmatpush1.msra.mxu0 %v200
        %223 = vmatprep.subr.mxu0 0.0
        %224 = vmatpush1.msra.mxu0 %v201
        %225 = vmatprep.subr.mxu0 0.0
        %226 = vmatpush1.msra.mxu0 %v202
        %227 = vmatprep.subr.mxu0 0.0
        %228 = vmatpush1.msra.mxu0 %v203
        %229 = vmatprep.subr.mxu0 0.0
        %230 = vmatpush1.msra.mxu0 %v204
        %231 = vmatprep.subr.mxu0 0.0
        %232 = vmatpush1.msra.mxu0 %v205
        %233 = vmatprep.subr.mxu0 0.0
        %234 = vmatpush1.msra.mxu0 %v206
        %235 = vmatprep.subr.mxu0 0.0
        %236 = vmatpush1.msra.mxu0 %v207
        %237 = vmatprep.subr.mxu0 0.0
        %238 = vmatpush1.msra.mxu0 %v208
        %239 = vmatprep.subr.mxu0 0.0
        %240 = vmatpush1.msra.mxu0 %v209
        %241 = vmatprep.subr.mxu0 0.0
        %242 = vmatpush1.msra.mxu0 %v210
        %243 = vmatprep.subr.mxu0 0.0
        %244 = vmatpush1.msra.mxu0 0.0
        %245 = vmatprep.subr.mxu0 0.0
        %246 = vmatpush1.msra.mxu0 0.0
        %247 = vmatprep.subr.mxu0 0.0
        %248 = vmatpush1.msra.mxu0 0.0
        %249 = vmatprep.subr.mxu0 0.0
        %250 = vmatpush1.msra.mxu0 0.0
        %251 = vmatprep.subr.mxu0 0.0
        %252 = vmatpush1.msra.mxu0 0.0
        %253 = vmatprep.subr.mxu0 0.0
        %254 = vmatpush1.msra.mxu0 0.0
        %255 = vmatprep.subr.mxu0 0.0
        %256 = vmatpush1.msra.mxu0 0.0
        %257 = vmatprep.subr.mxu0 0.0
        %258 = vmatpush1.msra.mxu0 0.0
        %259 = vmatprep.subr.mxu0 0.0
        %260 = vmatpush1.msra.mxu0 0.0
        %261 = vmatprep.subr.mxu0 0.0
        %262 = vmatpush1.msra.mxu0 0.0
        %263 = vmatprep.subr.mxu0 0.0
        %264 = vmatpush1.msra.mxu0 0.0
        %265 = vmatprep.subr.mxu0 0.0
        %266 = vmatpush1.msra.mxu0 0.0
        %267 = vmatprep.subr.mxu0 0.0
        %268 = vmatpush1.msra.mxu0 0.0
        %269 = vmatprep.subr.mxu0 0.0
        %270 = vmatpush1.msra.mxu0 0.0
        %271 = vmatprep.subr.mxu0 0.0
        %272 = vmatpush1.msra.mxu0 0.0
        %273 = vmatprep.subr.mxu0 0.0
        %274 = vmatpush1.msra.mxu0 0.0
        %275 = vmatprep.mubr.f32.mxu0 0.0
        %276 = vmatmul.mubr.f32.gmra.mrb[0].mxu0 %v179
        %v277 = vpop.f32.mrb[0].mxu0
        %v278 = vadd.f32 0.0, %v277
        %v279 = vpop.f32.mrb[0].mxu0
        %280 = vmatprep.mubr.f32.mxu0 0.0
        %281 = vmatmul.mubr.f32.gmra.mrb[0].mxu0 %v180
        %v282 = vpop.f32.mrb[0].mxu0
        %v283 = vadd.f32 0.0, %v282
        %v284 = vpop.f32.mrb[0].mxu0
        %285 = vmatprep.mubr.f32.mxu0 0.0
        %286 = vmatmul.mubr.f32.gmra.mrb[0].mxu0 %v181
        %v287 = vpop.f32.mrb[0].mxu0
        %v288 = vadd.f32 0.0, %v287
        %v289 = vpop.f32.mrb[0].mxu0
        %290 = vmatprep.mubr.f32.mxu0 0.0
        %291 = vmatmul.mubr.f32.gmra.mrb[0].mxu0 %v182
        %v292 = vpop.f32.mrb[0].mxu0
        %v293 = vadd.f32 0.0, %v292
        %v294 = vpop.f32.mrb[0].mxu0
        %295 = vmatprep.mubr.f32.mxu0 0.0
        %296 = vmatmul.mubr.f32.gmra.mrb[0].mxu0 %v183
        %v297 = vpop.f32.mrb[0].mxu0
        %v298 = vadd.f32 0.0, %v297
        %v299 = vpop.f32.mrb[0].mxu0
        %300 = vmatprep.mubr.f32.mxu0 0.0
        %301 = vmatmul.mubr.f32.gmra.mrb[0].mxu0 %v184
        %v302 = vpop.f32.mrb[0].mxu0
        %v303 = vadd.f32 0.0, %v302
        %v304 = vpop.f32.mrb[0].mxu0
        %305 = vmatprep.mubr.f32.mxu0 0.0
        %306 = vmatmul.mubr.f32.gmra.mrb[0].mxu0 %v185
        %v307 = vpop.f32.mrb[0].mxu0
        %v308 = vadd.f32 0.0, %v307
        %v309 = vpop.f32.mrb[0].mxu0
        %310 = vmatprep.mubr.f32.mxu0 0.0
        %311 = vmatmul.mubr.f32.gmra.mrb[0].mxu0 %v186
        %v312 = vpop.f32.mrb[0].mxu0
        %v313 = vadd.f32 0.0, %v312
        %v314 = vpop.f32.mrb[0].mxu0
        %315 = vmatprep.mubr.f32.mxu0 0.0
        %316 = vmatmul.mubr.f32.gmra.mrb[0].mxu0 %v187
        %v317 = vpop.f32.mrb[0].mxu0
        %v318 = vadd.f32 0.0, %v317
        %v319 = vpop.f32.mrb[0].mxu0
        %320 = vmatprep.mubr.f32.mxu0 0.0
        %321 = vmatmul.mubr.f32.gmra.mrb[0].mxu0 %v188
        %v322 = vpop.f32.mrb[0].mxu0
        %v323 = vadd.f32 0.0, %v322
        %v324 = vpop.f32.mrb[0].mxu0
        %325 = vmatprep.mubr.f32.mxu0 0.0
        %326 = vmatmul.mubr.f32.gmra.mrb[0].mxu0 %v189
        %v327 = vpop.f32.mrb[0].mxu0
        %v328 = vadd.f32 0.0, %v327
        %v329 = vpop.f32.mrb[0].mxu0
        %330 = vmatprep.mubr.f32.mxu0 0.0
        %331 = vmatmul.mubr.f32.gmra.mrb[0].mxu0 %v190
        %v332 = vpop.f32.mrb[0].mxu0
        %v333 = vadd.f32 0.0, %v332
        %v334 = vpop.f32.mrb[0].mxu0
        %335 = vmatprep.mubr.f32.mxu0 0.0
        %336 = vmatmul.mubr.f32.gmra.mrb[0].mxu0 %v191
        %v337 = vpop.f32.mrb[0].mxu0
        %v338 = vadd.f32 0.0, %v337
        %v339 = vpop.f32.mrb[0].mxu0
        %340 = vmatprep.mubr.f32.mxu0 0.0
        %341 = vmatmul.mubr.f32.gmra.mrb[0].mxu0 %v192
        %v342 = vpop.f32.mrb[0].mxu0
        %v343 = vadd.f32 0.0, %v342
        %v344 = vpop.f32.mrb[0].mxu0
        %345 = vmatprep.mubr.f32.mxu0 0.0
        %346 = vmatmul.mubr.f32.gmra.mrb[0].mxu0 %v193
        %v347 = vpop.f32.mrb[0].mxu0
        %v348 = vadd.f32 0.0, %v347
        %v349 = vpop.f32.mrb[0].mxu0
        %350 = vmatprep.mubr.f32.mxu0 0.0
        %351 = vmatmul.mubr.f32.gmra.mrb[0].mxu0 %v194
        %v352 = vpop.f32.mrb[0].mxu0
        %v353 = vadd.f32 0.0, %v352
        %v354 = vpop.f32.mrb[0].mxu0
        %355 = vdwg.mxu0
        %v356 = vadd.f32 %v278, %v283
        %v357 = vadd.f32 %v356, %v288
        %v358 = vadd.f32 %v357, %v293
        %v359 = vadd.f32 %v358, %v298
        %v360 = vadd.f32 %v359, %v303
        %v361 = vadd.f32 %v360, %v308
        %v362 = vadd.f32 %v361, %v313
        %v363 = vadd.f32 %v362, %v318
        %v364 = vadd.f32 %v363, %v323
        %v365 = vadd.f32 %v364, %v328
        %v366 = vadd.f32 %v365, %v333
        %v367 = vadd.f32 %v366, %v338
        %v368 = vadd.f32 %v367, %v343
        %v369 = vadd.f32 %v368, %v348
        %v370 = vadd.f32 %v369, %v353
        %v371 = vrot.slane %v370, 4
        %v372 = vadd.f32 %v370, %v371
        %v373 = vrot.slane %v372, 2
        %v374 = vadd.f32 %v372, %v373
        %v375 = vrot.slane %v374, 1
        %v376 = vadd.f32 %v374, %v375
        %v377 = vmul.f32 %v278, %v278
        %v378 = vmul.f32 %v283, %v283
        %v379 = vmul.f32 %v288, %v288
        %v380 = vmul.f32 %v293, %v293
        %v381 = vmul.f32 %v298, %v298
        %v382 = vmul.f32 %v303, %v303
        %v383 = vmul.f32 %v308, %v308
        %v384 = vmul.f32 %v313, %v313
        %v385 = vmul.f32 %v318, %v318
        %v386 = vmul.f32 %v323, %v323
        %v387 = vmul.f32 %v328, %v328
        %v388 = vmul.f32 %v333, %v333
        %v389 = vmul.f32 %v338, %v338
        %v390 = vmul.f32 %v343, %v343
        %v391 = vmul.f32 %v348, %v348
        %v392 = vmul.f32 %v353, %v353
        %v393 = vadd.f32 %v377, %v378
        %v394 = vadd.f32 %v393, %v379
        %v395 = vadd.f32 %v394, %v380
        %v396 = vadd.f32 %v395, %v381
        %v397 = vadd.f32 %v396, %v382
        %v398 = vadd.f32 %v397, %v383
        %v399 = vadd.f32 %v398, %v384
        %v400 = vadd.f32 %v399, %v385
        %v401 = vadd.f32 %v400, %v386
        %v402 = vadd.f32 %v401, %v387
        %v403 = vadd.f32 %v402, %v388
        %v404 = vadd.f32 %v403, %v389
        %v405 = vadd.f32 %v404, %v390
        %v406 = vadd.f32 %v405, %v391
        %v407 = vadd.f32 %v406, %v392
        %v408 = vrot.slane %v407, 4
        %v409 = vadd.f32 %v407, %v408
        %v410 = vrot.slane %v409, 2
        %v411 = vadd.f32 %v409, %v410
        %v412 = vrot.slane %v411, 1
        %v413 = vadd.f32 %v411, %v412
        %vm414 = vcmask 1040384
        %v415 = vsel %vm414, %v376, %v413
        %416 = vst [vmem:[%s177] sm:$0x3] %v415
        %s417 = sand.u32 %s75, 1
        %s418 = scalar_lea.sflag [#allocation4], %s417
        %s419 = sand.u32 %s75, 1
        %s420 = smul.addr %s419, 2
        %s421 = scalar_lea.vmem [#allocation7], %s420
        // Predicated region
        $region37: #{tpu_custom_call.1} parent=27 // pred_check
          %p422 = pneg %p85
        $region38: #{tpu_custom_call.1} parent=27 // pred_check_branch
          %424 = sbr.rel (%p422) target = $region40
        $region39: #{tpu_custom_call.1} parent=27 // pred_region
          %s426 = ssub.s32 32, 32
          %427 = vsyncadd %s418, %s426
          %s428 = smul.addr %s20, 32
          %s429 = scalar_lea.hbm %s2, %s428
          %s431 = sshll.u32 %s421, 4
          %s432 = int_to_ptr.vmem [resolvable:$true] %s431
          %434 = dma.vmem_to_hbm [thread:$0]  %s432, 32, %s429, %s418
        $region40: #{tpu_custom_call.1} parent=27 // pred_fallthru
          _
      $region28: #{tpu_custom_call.1} parent=5 // pred_fallthru
        _
      %p435 = scmp.le.s32.totalorder 2, %s15
      // Predicated region
      $region41: #{tpu_custom_call.1} parent=5 // pred_check
        %p436 = pneg %p435
      $region42: #{tpu_custom_call.1} parent=5 // pred_check_branch
        %438 = sbr.rel (%p436) target = $region44
      $region43: #{tpu_custom_call.1} parent=5 // pred_region
        %s439 = ssub.s32 %s15, 2
        // Predicated region
        $region45: #{tpu_custom_call.1} parent=43 // pred_check
          %p440 = pneg %p91
        $region46: #{tpu_custom_call.1} parent=43 // pred_check_branch
          %442 = sbr.rel (%p440) target = $region48
        $region47: #{tpu_custom_call.1} parent=43 // pred_region
          %s443 = sand.u32 %s76, 1
          %s444 = scalar_lea.sflag [#allocation4], %s443
          %s445 = sand.u32 %s76, 1
          %s446 = smul.addr %s445, 2
          %s447 = scalar_lea.vmem [#allocation7], %s446
          %448 = dma.done %s444, 32
        $region48: #{tpu_custom_call.1} parent=43 // pred_fallthru
          _
      $region44: #{tpu_custom_call.1} parent=5 // pred_fallthru
        _
    $region6: #{tpu_custom_call.1} parent=1 // loop_footer
      %s19 = sadd.s32 1, %s15
    $region7: #{tpu_custom_call.1} parent=1 // loop_footer_branch
      %14 = sbr.rel target = $region3
    $region8: #{tpu_custom_call.1} parent=1 // loop_exit
      _
    %449 = vsyncpa [#allocation3], 1
    %s450 = scalar_lea.sflag [#allocation3], 1
    %451 = vsyncpa %s450, 1
    %452 = vsyncpa [#allocation6], 1
    %453 = vsyncpa [#allocation4], 1
    %s454 = scalar_lea.sflag [#allocation4], 1
    %455 = vsyncpa %s454, 1

</llo_original>
